<compile_context>
chip_gen: v6e
topology: v6e:2x2x1
jax: 0.10.0
libtpu: 0.0.40
codegen_flags: <defaults>
</compile_context>

<pallas_src>
import functools

import jax
import jax.numpy as jnp
from jax.experimental import pallas as pl
from jax.experimental.pallas import tpu as pltpu


def _round_up(n, m):
    return (n + m - 1) // m * m


def _gate(x_ref, w1_ref, w2_ref, inv_hw):
    """Squeeze + excitation on a (bt, C, HW) slab -> (bt, C) gate in f32."""
    # f32-accumulating reduce; no slab-wide upcast of x.
    pooled = jnp.sum(x_ref[...], axis=2, dtype=jnp.float32) * inv_hw      # (bt, C)
    h = jnp.dot(pooled, w1_ref[...], preferred_element_type=jnp.float32)  # (bt, Cr)
    h = jnp.maximum(h, 0.0)
    s = jnp.dot(h, w2_ref[...], preferred_element_type=jnp.float32)       # (bt, C)
    return jax.nn.sigmoid(s)


def _se_scale_kernel(x_ref, w1_ref, w2_ref, o_ref, *, inv_hw):
    # x_ref/o_ref: (bt, C, HW)   w1_ref: (C, Cr)   w2_ref: (Cr, C)
    g = _gate(x_ref, w1_ref, w2_ref, inv_hw)                              # (bt, C)
    # Re-read the slab after the gate (short live range; VMEM reloads are
    # cheap) and multiply in the native dtype.
    o_ref[...] = x_ref[...] * g.astype(o_ref.dtype)[:, :, None]


def _se_gate_kernel(x_ref, w1_ref, w2_ref, g_ref, *, inv_hw):
    # g_ref: (bt, 1, C) -- last two block dims are full extents (always legal)
    # and C stays on the lane axis (lane-dense store, no relayout).
    g = _gate(x_ref, w1_ref, w2_ref, inv_hw)                              # (bt, C)
    g_ref[...] = g[:, None, :].astype(g_ref.dtype)


def _pick_batch_tile(b, c, hw, itemsize, *,
                     target_bytes=4 << 20, vmem_budget=40 << 20):
    """Batch-tile picker.

    * Uses lane-padded bytes per batch row (c * round_up(hw, 128) * itemsize).
    * Targets ~4 MiB blocks (amortizes ~0.35us per-grid-step overhead even at
      v7x's 3.2 TB/s) while keeping the 2x(in+out) pipelined footprint within
      an explicit VMEM budget (safe on v7x's 64 MiB physical VMEM).
    * Keeps >= min(4, B) grid steps so both v7x TensorCores get >= 2 steps.
    """
    per_row = c * _round_up(hw, 128) * max(int(itemsize), 1)
    max_rows_vmem = max(1, vmem_budget // (4 * per_row))   # 2 buffers x (in+out)
    bt = max(1, min(b, target_bytes // per_row, max_rows_vmem))
    min_steps = min(4, b)
    if min_steps > 1:
        bt = min(bt, max(1, b // min_steps))
    return bt


def se_layer(x, w1, w2, *, mul_input=True, batch_tile=None):
    """x: (B, C, H, W); w1: (C, C//r); w2: (C//r, C). Returns (B, C, H, W)."""
    b, c, h, w = x.shape
    hw = h * w
    inv_hw = 1.0 / hw
    cr = w1.shape[1]
    itemsize = x.dtype.itemsize

    bt = batch_tile if batch_tile is not None else _pick_batch_tile(b, c, hw, itemsize)
    bt = max(1, min(int(bt), b))
    grid_steps = pl.cdiv(b, bt)
    b_pad = grid_steps * bt

    x_flat = x.reshape(b, c, hw)
    if b_pad != b:
        # Pad the tail so no output rows are left unwritten; padded rows are
        # computed (gate = sigmoid(0)) and sliced off below.
        x_flat = jnp.pad(x_flat, ((0, b_pad - b), (0, 0), (0, 0)))

    x_spec = pl.BlockSpec((bt, c, hw), lambda i: (i, 0, 0))
    w1_spec = pl.BlockSpec((c, cr), lambda i: (0, 0))
    w2_spec = pl.BlockSpec((cr, c), lambda i: (0, 0))
    cparams = pltpu.CompilerParams(
        dimension_semantics=("parallel",),
        vmem_limit_bytes=48 << 20,
    )
    wbytes = int((w1.size + w2.size) * w1.dtype.itemsize)

    if mul_input:
        cost = pl.CostEstimate(
            flops=int(2 * b * c * hw + 4 * b * c * cr),
            transcendentals=int(b * c),
            bytes_accessed=int(2 * b * c * hw * itemsize + wbytes),
        )
        out_flat = pl.pallas_call(
            functools.partial(_se_scale_kernel, inv_hw=inv_hw),
            out_shape=jax.ShapeDtypeStruct((b_pad, c, hw), x.dtype),
            grid_spec=pltpu.PrefetchScalarGridSpec(
                num_scalar_prefetch=0,
                grid=(grid_steps,),
                in_specs=[x_spec, w1_spec, w2_spec],
                out_specs=pl.BlockSpec((bt, c, hw), lambda i: (i, 0, 0)),
            ),
            compiler_params=cparams,
            cost_estimate=cost,
            input_output_aliases={0: 0},   # in-place elementwise scale
        )(x_flat, w1, w2)
        return out_flat[:b].reshape(b, c, h, w)

    # mul_input=False: emit only the (b, 1, C) gate; HW broadcast stays lazy.
    cost = pl.CostEstimate(
        flops=int(b * c * hw + 4 * b * c * cr),
        transcendentals=int(b * c),
        bytes_accessed=int(b * c * hw * itemsize + b * c * 4 + wbytes),
    )
    gate = pl.pallas_call(
        functools.partial(_se_gate_kernel, inv_hw=inv_hw),
        out_shape=jax.ShapeDtypeStruct((b_pad, 1, c), jnp.float32),
        grid_spec=pltpu.PrefetchScalarGridSpec(
            num_scalar_prefetch=0,
            grid=(grid_steps,),
            in_specs=[x_spec, w1_spec, w2_spec],
            out_specs=pl.BlockSpec((bt, 1, c), lambda i: (i, 0, 0)),
        ),
        compiler_params=cparams,
        cost_estimate=cost,
    )(x_flat, w1, w2)
    gate = gate[:b].reshape(b, c).astype(x.dtype)
    return jnp.broadcast_to(gate[:, :, None, None], (b, c, h, w))


def se_layer_ref(x, w1, w2, *, mul_input=True):
    """Pure-JAX reference matching the PyTorch forward (f32 inputs)."""
    y = jnp.mean(x, axis=(2, 3))                    # (B, C)
    y = jnp.maximum(y @ w1, 0.0)                    # (B, Cr)
    y = jax.nn.sigmoid(y @ w2)                      # (B, C)
    y = y[:, :, None, None]                         # (B, C, 1, 1)
    if mul_input:
        return x * y
    return jnp.broadcast_to(y, x.shape).astype(x.dtype)


if __name__ == "__main__":
    # Module config: channel=32, reduction=16 (default) -> hidden = 2.
    B, C, H, W = 2, 32, 8, 8
    reduction = 16
    Cr = C // reduction

    key = jax.random.PRNGKey(0)
    kx, k1, k2, k3 = jax.random.split(key, 4)
    x = jax.random.normal(kx, (B, C, H, W), dtype=jnp.float32)
    # PyTorch Linear weight is (out, in); store the transposed (in, out) layout
    # so the kernel does pooled @ W directly (no in-kernel transposes).
    w1 = jax.random.normal(k1, (C, Cr), dtype=jnp.float32) / jnp.sqrt(C)
    w2 = jax.random.normal(k2, (Cr, C), dtype=jnp.float32) / jnp.sqrt(Cr)

    # mul_input=True (fused scale) path.
    out = jax.block_until_ready(se_layer(x, w1, w2, mul_input=True))
    ref = se_layer_ref(x, w1, w2, mul_input=True)
    assert out.shape == x.shape
    assert jnp.allclose(out, ref, atol=1e-5, rtol=1e-5), "mismatch vs reference"

    # mul_input=False (gate-only) path.
    out2 = jax.block_until_ready(se_layer(x, w1, w2, mul_input=False))
    ref2 = se_layer_ref(x, w1, w2, mul_input=False)
    assert jnp.allclose(out2, ref2, atol=1e-5, rtol=1e-5), "mismatch (mul_input=False)"

    # Ragged batch (B not a multiple of the tile): padded-grid path.
    x3 = jax.random.normal(k3, (3, C, H, W), dtype=jnp.float32)
    out3 = jax.block_until_ready(se_layer(x3, w1, w2, mul_input=True, batch_tile=2))
    ref3 = se_layer_ref(x3, w1, w2, mul_input=True)
    assert jnp.allclose(out3, ref3, atol=1e-5, rtol=1e-5), "mismatch (ragged batch)"

    print("KERNEL_OK")
</pallas_src>

<mosaic_0001>
module attributes {stable_mosaic.version = 11 : i64} {
  func.func @_se_scale_kernel(%arg0: i32, %arg1: memref<1x32x64xf32, #tpu.memory_space<vmem>>, %arg2: memref<32x2xf32, #tpu.memory_space<vmem>>, %arg3: memref<2x32xf32, #tpu.memory_space<vmem>>, %arg4: memref<1x32x64xf32, #tpu.memory_space<vmem>>) attributes {dimension_semantics = [#tpu.dimension_semantics<parallel>], iteration_bounds = array<i64: 2>, scalar_prefetch = 0 : i64, scratch_operands = 0 : i64, tpu.core_type = #tpu.core_type<tc>, window_params = [{transform_indices = @transform_0, window_bounds = array<i64: 1, 32, 64>}, {pipeline_mode = #tpu.pipeline_mode<synchronous>, transform_indices = @transform_1, window_bounds = array<i64: 32, 2>}, {pipeline_mode = #tpu.pipeline_mode<synchronous>, transform_indices = @transform_2, window_bounds = array<i64: 2, 32>}, {transform_indices = @transform_3, window_bounds = array<i64: 1, 32, 64>}]} {
    %c0 = arith.constant 0 : index
    %c0_0 = arith.constant 0 : index
    %c0_1 = arith.constant 0 : index
    %0 = vector.load %arg1[%c0, %c0_0, %c0_1] : memref<1x32x64xf32, #tpu.memory_space<vmem>>, vector<1x32x64xf32>
    %cst = arith.constant dense<0.000000e+00> : vector<1x32xf32>
    %1 = vector.multi_reduction <add>, %0, %cst [2] : vector<1x32x64xf32> to vector<1x32xf32>
    %cst_2 = arith.constant 1.562500e-02 : f32
    %2 = vector.broadcast %cst_2 : f32 to vector<1x32xf32>
    %3 = arith.mulf %1, %2 : vector<1x32xf32>
    %c0_3 = arith.constant 0 : index
    %c0_4 = arith.constant 0 : index
    %4 = vector.load %arg2[%c0_3, %c0_4] : memref<32x2xf32, #tpu.memory_space<vmem>>, vector<32x2xf32>
    %cst_5 = arith.constant dense<0.000000e+00> : vector<1x2xf32>
    %5 = tpu.matmul %3, %4, %cst_5 {dimension_numbers = #tpu.dot_dimension_numbers<[1], [0], [0], [1], [0, 0, 1, 1], [], []>} : vector<1x32xf32>, vector<32x2xf32>, vector<1x2xf32> -> vector<1x2xf32>
    %cst_6 = arith.constant 0.000000e+00 : f32
    %6 = vector.broadcast %cst_6 : f32 to vector<1x2xf32>
    %7 = arith.maximumf %5, %6 : vector<1x2xf32>
    %c0_7 = arith.constant 0 : index
    %c0_8 = arith.constant 0 : index
    %8 = vector.load %arg3[%c0_7, %c0_8] : memref<2x32xf32, #tpu.memory_space<vmem>>, vector<2x32xf32>
    %cst_9 = arith.constant dense<0.000000e+00> : vector<1x32xf32>
    %9 = tpu.matmul %7, %8, %cst_9 {dimension_numbers = #tpu.dot_dimension_numbers<[1], [0], [0], [1], [0, 0, 1, 1], [], []>} : vector<1x2xf32>, vector<2x32xf32>, vector<1x32xf32> -> vector<1x32xf32>
    %10 = arith.negf %9 : vector<1x32xf32>
    %11 = math.exp %10 : vector<1x32xf32>
    %cst_10 = arith.constant 1.000000e+00 : f32
    %12 = vector.broadcast %cst_10 : f32 to vector<1x32xf32>
    %13 = arith.addf %12, %11 : vector<1x32xf32>
    %14 = arith.divf %12, %13 : vector<1x32xf32>
    %c0_11 = arith.constant 0 : index
    %c0_12 = arith.constant 0 : index
    %c0_13 = arith.constant 0 : index
    %15 = vector.load %arg1[%c0_11, %c0_12, %c0_13] : memref<1x32x64xf32, #tpu.memory_space<vmem>>, vector<1x32x64xf32>
    %16 = vector.shape_cast %14 : vector<1x32xf32> to vector<1x32x1xf32>
    %17 = vector.broadcast %16 : vector<1x32x1xf32> to vector<1x32x64xf32>
    %18 = arith.mulf %15, %17 : vector<1x32x64xf32>
    %c0_14 = arith.constant 0 : index
    %c0_15 = arith.constant 0 : index
    %c0_16 = arith.constant 0 : index
    %19 = vector.load %arg4[%c0_14, %c0_15, %c0_16] : memref<1x32x64xf32, #tpu.memory_space<vmem>>, vector<1x32x64xf32>
    tpu.vector_store %arg4[%c0_14, %c0_15, %c0_16], %18 {strides = array<i32>} : memref<1x32x64xf32, #tpu.memory_space<vmem>>, vector<1x32x64xf32>,
    return
  }
  func.func @transform_0(%arg0: i32) -> (i32, i32, i32) {
    %c0_i32 = arith.constant 0 : i32
    %c0_i32_0 = arith.constant 0 : i32
    %c0_i32_1 = arith.constant 0 : i32
    return %arg0, %c0_i32, %c0_i32_0 : i32, i32, i32
  }
  func.func @transform_1(%arg0: i32) -> (i32, i32) {
    %c0_i32 = arith.constant 0 : i32
    %c0_i32_0 = arith.constant 0 : i32
    %c0_i32_1 = arith.constant 0 : i32
    return %c0_i32, %c0_i32_0 : i32, i32
  }
  func.func @transform_2(%arg0: i32) -> (i32, i32) {
    %c0_i32 = arith.constant 0 : i32
    %c0_i32_0 = arith.constant 0 : i32
    %c0_i32_1 = arith.constant 0 : i32
    return %c0_i32, %c0_i32_0 : i32, i32
  }
  func.func @transform_3(%arg0: i32) -> (i32, i32, i32) {
    %c0_i32 = arith.constant 0 : i32
    %c0_i32_0 = arith.constant 0 : i32
    %c0_i32_1 = arith.constant 0 : i32
    return %arg0, %c0_i32, %c0_i32_0 : i32, i32, i32
  }
}

</mosaic_0001>

<llo_original>
// kernel: tpu_custom_call.1
$region0: #{tpu_custom_call.1}
  #allocation0 [shape = 'u32[]', space=smem, size = 0x4, offset = 0x4, fixed_abs, tag = 'smem constant byte address 0x4 - core index']
  #allocation1 [shape = 'u32[144,128]{1,0:T(1,128)}', space=vmem, size = 0x12000, scoped, tag = 'internal scratch']
  %s0 = inlined_call_operand.hbm [shape: f32[2,32,64], index: 0, kind: input, shape index: {}, may-alias: {0,3}]
  %s1 = inlined_call_operand.vmem [shape: f32[32,2], index: 1, kind: input, shape index: {}]
  %s2 = inlined_call_operand.vmem [shape: f32[2,32], index: 2, kind: input, shape index: {}]
  %s3 = inlined_call_operand.hbm [shape: f32[2,32,64], index: 3, kind: output, shape index: {}, may-alias: {0,3}]
  %s4 = sld [smem:[#allocation0]]
  $region49: #{tpu_custom_call.1} parent=0
    _
  %s6 = ssub.s32 1, %s4
  %s7 = scalar_select 0, %s6, %s4
  $region1: #{tpu_custom_call.1} parent=0
    #allocation2 [shape = 'u8[32768]{0}', space=vmem, size = 0x8000, scoped, tag = 'input window, operand 0']
    #allocation3 [shape = 's32[2]{0}', space=sflag, size = 0x8, scoped, tag = 'scoped memory for tpu_custom_call.1']
    #allocation4 [shape = 's32[2]{0}', space=sflag, size = 0x8, scoped, tag = 'scoped memory for tpu_custom_call.1']
    #allocation5 [shape = 'u8[32768]{0}', space=vmem, size = 0x8000, scoped, tag = 'output window, operand 0']
    %8 = vsyncpa [#allocation3], 0
    %s9 = scalar_lea.sflag [#allocation3], 1
    %10 = vsyncpa %s9, 0
    %11 = vsyncpa [#allocation4], 0
    %s12 = scalar_lea.sflag [#allocation4], 1
    %13 = vsyncpa %s12, 0
    loop: start=0, step=1, limit=4
    $region2: #{tpu_custom_call.1} parent=1 // loop_pre_header
      _
    $region3: #{tpu_custom_call.1} parent=1 // loop_header
      %s15 = sphi 0, %s19
      %p16 = scmp.ge.s32.totalorder %s15, 4
      %s25 = sphi 0, %s27
      %s28 = sphi 0, %s25
      %s29 = sphi 0, %s28
      %s45 = sphi 0, %s29
      %s49 = sphi 0, %s49
      %s51 = sphi 0, %s49
      %s52 = sphi 0, %s51
      %s66 = sphi 0, %s52
      %s70 = sphi 0, %s70
      %s72 = sphi 0, %s70
      %s73 = sphi 0, %s72
      %s87 = sphi 0, %s73
      %s93 = sphi 0, %s95
      %s96 = sphi 0, %s93
      %s97 = sphi 0, %s96
      %s113 = sphi 0, %s97
    $region4: #{tpu_custom_call.1} parent=1 // loop_header_branch
      %18 = sbr.rel (%p16) target = $region8
    $region5: #{tpu_custom_call.1} parent=1 // loop_body
      %s20 = ssub.s32 %s15, 1
      %s21 = ssub.s32 %s15, 2
      %s22 = sadd.s32 %s15, 1
      %s23 = ssub.s32 %s15, %s22
      %p24 = scmp.eq.s32.totalorder %s23, 0
      %s26 = sadd.s32 %s25, 1
      %s27 = scalar_select %p24, %s25, %s26
      %p30 = pneg %p24
      %p31 = scmp.eq.s32.totalorder %s15, 1
      %p32 = por %p30, %p31
      %p33 = scmp.ne.s32.totalorder %s25, %s28
      %p34 = scmp.eq.s32.totalorder %s15, 0
      %p35 = por %p33, %p34
      %p36 = scmp.ne.s32.totalorder %s25, %s28
      %p37 = scmp.eq.s32.totalorder %s20, 1
      %p38 = por %p36, %p37
      %p39 = scmp.ne.s32.totalorder %s28, %s29
      %p40 = scmp.eq.s32.totalorder %s20, 0
      %p41 = por %p39, %p40
      %p42 = scmp.ne.s32.totalorder %s28, %s29
      %p43 = scmp.eq.s32.totalorder %s21, 1
      %p44 = por %p42, %p43
      %p46 = scmp.ne.s32.totalorder %s29, %s45
      %p47 = scmp.eq.s32.totalorder %s21, 0
      %p48 = por %p46, %p47
      %s50 = sadd.s32 %s49, 1
      %p53 = scmp.eq.s32.totalorder %s15, 1
      %p54 = scmp.ne.s32.totalorder %s49, %s51
      %p55 = scmp.eq.s32.totalorder %s15, 0
      %p56 = por %p54, %p55
      %p57 = scmp.ne.s32.totalorder %s49, %s51
      %p58 = scmp.eq.s32.totalorder %s20, 1
      %p59 = por %p57, %p58
      %p60 = scmp.ne.s32.totalorder %s51, %s52
      %p61 = scmp.eq.s32.totalorder %s20, 0
      %p62 = por %p60, %p61
      %p63 = scmp.ne.s32.totalorder %s51, %s52
      %p64 = scmp.eq.s32.totalorder %s21, 1
      %p65 = por %p63, %p64
      %p67 = scmp.ne.s32.totalorder %s52, %s66
      %p68 = scmp.eq.s32.totalorder %s21, 0
      %p69 = por %p67, %p68
      %s71 = sadd.s32 %s70, 1
      %p74 = scmp.eq.s32.totalorder %s15, 1
      %p75 = scmp.ne.s32.totalorder %s70, %s72
      %p76 = scmp.eq.s32.totalorder %s15, 0
      %p77 = por %p75, %p76
      %p78 = scmp.ne.s32.totalorder %s70, %s72
      %p79 = scmp.eq.s32.totalorder %s20, 1
      %p80 = por %p78, %p79
      %p81 = scmp.ne.s32.totalorder %s72, %s73
      %p82 = scmp.eq.s32.totalorder %s20, 0
      %p83 = por %p81, %p82
      %p84 = scmp.ne.s32.totalorder %s72, %s73
      %p85 = scmp.eq.s32.totalorder %s21, 1
      %p86 = por %p84, %p85
      %p88 = scmp.ne.s32.totalorder %s73, %s87
      %p89 = scmp.eq.s32.totalorder %s21, 0
      %p90 = por %p88, %p89
      %s91 = ssub.s32 %s15, %s22
      %p92 = scmp.eq.s32.totalorder %s91, 0
      %s94 = sadd.s32 %s93, 1
      %s95 = scalar_select %p92, %s93, %s94
      %p98 = pneg %p92
      %p99 = scmp.eq.s32.totalorder %s15, 1
      %p100 = por %p98, %p99
      %p101 = scmp.ne.s32.totalorder %s93, %s96
      %p102 = scmp.eq.s32.totalorder %s15, 0
      %p103 = por %p101, %p102
      %p104 = scmp.ne.s32.totalorder %s93, %s96
      %p105 = scmp.eq.s32.totalorder %s20, 1
      %p106 = por %p104, %p105
      %p107 = scmp.ne.s32.totalorder %s96, %s97
      %p108 = scmp.eq.s32.totalorder %s20, 0
      %p109 = por %p107, %p108
      %p110 = scmp.ne.s32.totalorder %s96, %s97
      %p111 = scmp.eq.s32.totalorder %s21, 1
      %p112 = por %p110, %p111
      %p114 = scmp.ne.s32.totalorder %s97, %s113
      %p115 = scmp.eq.s32.totalorder %s21, 0
      %p116 = por %p114, %p115
      %p117 = scmp.le.s32.totalorder 1, %s15
      %p118 = scmp.lt.s32.totalorder %s15, 3
      %p119 = pnand %p117, %p118
      %p120 = pneg %p119
      // Predicated region
      $region9: #{tpu_custom_call.1} parent=5 // pred_check
        _
      $region10: #{tpu_custom_call.1} parent=5 // pred_check_branch
        %122 = sbr.rel (%p119) target = $region12
      $region11: #{tpu_custom_call.1} parent=5 // pred_region
        %s123 = ssub.s32 %s15, 1
        // Predicated region
        $region13: #{tpu_custom_call.1} parent=11 // pred_check
          %p124 = pneg %p62
        $region14: #{tpu_custom_call.1} parent=11 // pred_check_branch
          %126 = sbr.rel (%p124) target = $region16
        $region15: #{tpu_custom_call.1} parent=11 // pred_region
          _
        $region16: #{tpu_custom_call.1} parent=11 // pred_fallthru
          _
        // Predicated region
        $region17: #{tpu_custom_call.1} parent=11 // pred_check
          %p127 = pneg %p83
        $region18: #{tpu_custom_call.1} parent=11 // pred_check_branch
          %129 = sbr.rel (%p127) target = $region20
        $region19: #{tpu_custom_call.1} parent=11 // pred_region
          _
        $region20: #{tpu_custom_call.1} parent=11 // pred_fallthru
          _
      $region12: #{tpu_custom_call.1} parent=5 // pred_fallthru
        _
      %p130 = scmp.lt.s32.totalorder %s15, 2
      // Predicated region
      $region21: #{tpu_custom_call.1} parent=5 // pred_check
        %p131 = pneg %p130
      $region22: #{tpu_custom_call.1} parent=5 // pred_check_branch
        %133 = sbr.rel (%p131) target = $region24
      $region23: #{tpu_custom_call.1} parent=5 // pred_region
        // Predicated region
        $region25: #{tpu_custom_call.1} parent=23 // pred_check
          %p134 = pneg %p35
        $region26: #{tpu_custom_call.1} parent=23 // pred_check_branch
          %136 = sbr.rel (%p134) target = $region28
        $region27: #{tpu_custom_call.1} parent=23 // pred_region
          %s137 = sand.u32 %s25, 1
          %s138 = scalar_lea.sflag [#allocation3], %s137
          %s139 = sand.u32 %s25, 1
          %s140 = smul.addr %s139, 32
          %s141 = scalar_lea.vmem [#allocation2], %s140
          %s143 = ssub.s32 512, 512
          %144 = vsyncadd %s138, %s143
          %s145 = smul.addr %s15, 4
          %s146 = smul.addr %s145, 128
          %s147 = scalar_lea.hbm %s0, %s146
          %s148 = sshll.u32 %s141, 4
          %s149 = int_to_ptr.vmem [resolvable:$true] %s148
          %154 = dma.hbm_to_vmem [thread:$0]  %s147, 512, %s149, %s138, 128, 128, 8
        $region28: #{tpu_custom_call.1} parent=23 // pred_fallthru
          _
      $region24: #{tpu_custom_call.1} parent=5 // pred_fallthru
        _
      %p155 = scmp.le.s32.totalorder 1, %s15
      %p156 = scmp.lt.s32.totalorder %s15, 3
      %p157 = pnand %p155, %p156
      %p158 = pneg %p157
      // Predicated region
      $region29: #{tpu_custom_call.1} parent=5 // pred_check
        _
      $region30: #{tpu_custom_call.1} parent=5 // pred_check_branch
        %160 = sbr.rel (%p157) target = $region32
      $region31: #{tpu_custom_call.1} parent=5 // pred_region
        %s161 = ssub.s32 %s15, 1
        %s162 = sand.u32 %s28, 1
        %s163 = scalar_lea.sflag [#allocation3], %s162
        %s164 = sand.u32 %s28, 1
        %s165 = smul.addr %s164, 32
        %s166 = scalar_lea.vmem [#allocation2], %s165
        // Predicated region
        $region33: #{tpu_custom_call.1} parent=31 // pred_check
          %p167 = pneg %p41
        $region34: #{tpu_custom_call.1} parent=31 // pred_check_branch
          %169 = sbr.rel (%p167) target = $region36
        $region35: #{tpu_custom_call.1} parent=31 // pred_region
          %170 = dma.done %s163, 512
        $region36: #{tpu_custom_call.1} parent=31 // pred_fallthru
          _
        %s171 = sand.u32 %s28, 1
        %s172 = scalar_lea.sflag [#allocation3], %s171
        %s173 = sand.u32 %s28, 1
        %s174 = smul.addr %s173, 32
        %s175 = scalar_lea.vmem [#allocation2], %s174
        %p176 = pneg %p41
        %p177 = pneg %p38
        %p178 = pneg %p62
        %p179 = pneg %p59
        %p180 = pneg %p83
        %p181 = pneg %p80
        %p182 = pneg %p109
        %p183 = pneg %p106
        %s184 = sand.u32 %s96, 1
        %s185 = scalar_lea.sflag [#allocation4], %s184
        %s186 = sand.u32 %s96, 1
        %s187 = smul.addr %s186, 32
        %s188 = scalar_lea.vmem [#allocation5], %s187
        %v189 = vld [vmem:[%s166] sm:$0xff]
        %v190 = vld [vmem:[%s166 + $0x8] sm:$0xff]
        %v191 = vld [vmem:[%s166 + $0x10] sm:$0xff]
        %v192 = vld [vmem:[%s166 + $0x18] sm:$0xff]
        %vm193 = vcmask 523264
        %v194 = vsel %vm193, %v189, 0.0
        %195 = vadd.xlane.f32.xlu0 %v194
        %v196 = vpop.xlane.xlu0 %195
        %v197 = vsel %vm193, %v190, 0.0
        %198 = vadd.xlane.f32.xlu0 %v197
        %v199 = vpop.xlane.xlu0 %198
        %v200 = vsel %vm193, %v191, 0.0
        %201 = vadd.xlane.f32.xlu0 %v200
        %v202 = vpop.xlane.xlu0 %201
        %v203 = vsel %vm193, %v192, 0.0
        %204 = vadd.xlane.f32.xlu0 %v203
        %v205 = vpop.xlane.xlu0 %204
        %v206 = vmul.f32 %v196, 0.015625
        %v207 = vmul.f32 %v199, 0.015625
        %v208 = vmul.f32 %v202, 0.015625
        %v209 = vmul.f32 %v205, 0.015625
        %v210 = vld [vmem:[%s1] sm:$0xff]
        %v211 = vld [vmem:[%s1 + $0x8] sm:$0xff]
        %v212 = vld [vmem:[%s1 + $0x10] sm:$0xff]
        %v213 = vld [vmem:[%s1 + $0x18] sm:$0xff]
        %v218 = vlaneseq
        %v219 = vand.u32 %v218, 127
        %v220 = vlaneseq
        %v221 = vshrl.u32 %v220, 7
        %v222 = vsub.s32 %v219, %v221
        %v223 = vrot.slane %v206, %v222
        %v224 = vadd.s32 %v219, 4294967288
        %v225 = vlaneseq
        %v226 = vshrl.u32 %v225, 7
        %v227 = vsub.s32 %v224, %v226
        %v228 = vrot.slane %v207, %v227
        %vm229 = vcmask 130112
        %v230 = vsel %vm229, %v228, %v223
        %v231 = vadd.s32 %v219, 4294967280
        %v232 = vlaneseq
        %v233 = vshrl.u32 %v232, 7
        %v234 = vsub.s32 %v231, %v233
        %v235 = vrot.slane %v208, %v234
        %vm236 = vcmask 195712
        %v237 = vsel %vm236, %v235, %v230
        %v238 = vadd.s32 %v219, 4294967272
        %v239 = vlaneseq
        %v240 = vshrl.u32 %v239, 7
        %v241 = vsub.s32 %v238, %v240
        %v242 = vrot.slane %v209, %v241
        %vm243 = vcmask 261312
        %v244 = vsel %vm243, %v242, %v237
        %vm245 = vcmask 261120
        %v246 = vsel %vm245, %v244, 0
        %248 = vmatprep.subr.mxu0 0.0
        %249 = vmatpush1.msra.mxu0 0.0
        %250 = vmatprep.subr.mxu0 0.0
        %251 = vmatpush1.msra.mxu0 0.0
        %252 = vmatprep.subr.mxu0 0.0
        %253 = vmatpush1.msra.mxu0 0.0
        %254 = vmatprep.subr.mxu0 0.0
        %255 = vmatpush1.msra.mxu0 0.0
        %256 = vmatprep.subr.mxu0 0.0
        %257 = vmatpush1.msra.mxu0 0.0
        %258 = vmatprep.subr.mxu0 0.0
        %259 = vmatpush1.msra.mxu0 0.0
        %260 = vmatprep.subr.mxu0 0.0
        %261 = vmatpush1.msra.mxu0 0.0
        %262 = vmatprep.subr.mxu0 0.0
        %263 = vmatpush1.msra.mxu0 0.0
        %264 = vmatprep.subr.mxu0 0.0
        %265 = vmatpush1.msra.mxu0 0.0
        %266 = vmatprep.subr.mxu0 0.0
        %267 = vmatpush1.msra.mxu0 0.0
        %268 = vmatprep.subr.mxu0 0.0
        %269 = vmatpush1.msra.mxu0 0.0
        %270 = vmatprep.subr.mxu0 0.0
        %271 = vmatpush1.msra.mxu0 0.0
        %272 = vmatprep.subr.mxu0 0.0
        %273 = vmatpush1.msra.mxu0 %v213
        %274 = vmatprep.subr.mxu0 0.0
        %275 = vmatpush1.msra.mxu0 %v212
        %276 = vmatprep.subr.mxu0 0.0
        %277 = vmatpush1.msra.mxu0 %v211
        %278 = vmatprep.subr.mxu0 0.0
        %279 = vmatpush1.msra.mxu0 %v210
        %280 = vmatprep.subr.mxu0 0.0
        %281 = vmatpush2.msra.mxu0 0.0
        %282 = vmatprep.subr.mxu0 0.0
        %283 = vmatpush2.msra.mxu0 0.0
        %284 = vmatprep.subr.mxu0 0.0
        %285 = vmatpush2.msra.mxu0 0.0
        %286 = vmatprep.subr.mxu0 0.0
        %287 = vmatpush2.msra.mxu0 0.0
        %288 = vmatprep.subr.mxu0 0.0
        %289 = vmatpush2.msra.mxu0 0.0
        %290 = vmatprep.subr.mxu0 0.0
        %291 = vmatpush2.msra.mxu0 0.0
        %292 = vmatprep.subr.mxu0 0.0
        %293 = vmatpush2.msra.mxu0 0.0
        %294 = vmatprep.subr.mxu0 0.0
        %295 = vmatpush2.msra.mxu0 0.0
        %296 = vmatprep.subr.mxu0 0.0
        %297 = vmatpush2.msra.mxu0 0.0
        %298 = vmatprep.subr.mxu0 0.0
        %299 = vmatpush2.msra.mxu0 0.0
        %300 = vmatprep.subr.mxu0 0.0
        %301 = vmatpush2.msra.mxu0 0.0
        %302 = vmatprep.subr.mxu0 0.0
        %303 = vmatpush2.msra.mxu0 0.0
        %304 = vmatprep.subr.mxu0 0.0
        %305 = vmatpush2.msra.mxu0 0.0
        %306 = vmatprep.subr.mxu0 0.0
        %307 = vmatpush2.msra.mxu0 0.0
        %308 = vmatprep.subr.mxu0 0.0
        %309 = vmatpush2.msra.mxu0 0.0
        %310 = vmatprep.subr.mxu0 0.0
        %311 = vmatpush2.msra.mxu0 0.0
        %312 = vmatprep.mubr.f32.mxu0 0.0
        %313 = vmatmul.mubr.f32.gmra.mxu0 %v246
        %v314 = vpop.f32.mrf.mxu0
        %v315 = vadd.f32 0.0, %v314
        %v316 = vpop.f32.mrf.mxu0
        %317 = vdwg.mxu0
        %v318 = vmax.f32 %v315, 0.0
        %v319 = vld [vmem:[%s2] sm:$0x3]
        %vm320 = vcmask 15360
        %v322 = vsel %vm320, %v318, 0
        %vm324 = vcmask 1041408
        %v326 = vsel %vm324, %v319, 0
        %328 = vmatprep.subr.mxu0 0.0
        %329 = vmatpush1.msra.mxu0 0.0
        %330 = vmatprep.subr.mxu0 0.0
        %331 = vmatpush1.msra.mxu0 0.0
        %332 = vmatprep.subr.mxu0 0.0
        %333 = vmatpush1.msra.mxu0 0.0
        %334 = vmatprep.subr.mxu0 0.0
        %335 = vmatpush1.msra.mxu0 0.0
        %336 = vmatprep.subr.mxu0 0.0
        %337 = vmatpush1.msra.mxu0 0.0
        %338 = vmatprep.subr.mxu0 0.0
        %339 = vmatpush1.msra.mxu0 0.0
        %340 = vmatprep.subr.mxu0 0.0
        %341 = vmatpush1.msra.mxu0 0.0
        %342 = vmatprep.subr.mxu0 0.0
        %343 = vmatpush1.msra.mxu0 0.0
        %344 = vmatprep.subr.mxu0 0.0
        %345 = vmatpush1.msra.mxu0 0.0
        %346 = vmatprep.subr.mxu0 0.0
        %347 = vmatpush1.msra.mxu0 0.0
        %348 = vmatprep.subr.mxu0 0.0
        %349 = vmatpush1.msra.mxu0 0.0
        %350 = vmatprep.subr.mxu0 0.0
        %351 = vmatpush1.msra.mxu0 0.0
        %352 = vmatprep.subr.mxu0 0.0
        %353 = vmatpush1.msra.mxu0 0.0
        %354 = vmatprep.subr.mxu0 0.0
        %355 = vmatpush1.msra.mxu0 0.0
        %356 = vmatprep.subr.mxu0 0.0
        %357 = vmatpush1.msra.mxu0 0.0
        %358 = vmatprep.subr.mxu0 0.0
        %359 = vmatpush1.msra.mxu0 %v326
        %360 = vmatprep.subr.mxu0 0.0
        %361 = vmatpush2.msra.mxu0 0.0
        %362 = vmatprep.subr.mxu0 0.0
        %363 = vmatpush2.msra.mxu0 0.0
        %364 = vmatprep.subr.mxu0 0.0
        %365 = vmatpush2.msra.mxu0 0.0
        %366 = vmatprep.subr.mxu0 0.0
        %367 = vmatpush2.msra.mxu0 0.0
        %368 = vmatprep.subr.mxu0 0.0
        %369 = vmatpush2.msra.mxu0 0.0
        %370 = vmatprep.subr.mxu0 0.0
        %371 = vmatpush2.msra.mxu0 0.0
        %372 = vmatprep.subr.mxu0 0.0
        %373 = vmatpush2.msra.mxu0 0.0
        %374 = vmatprep.subr.mxu0 0.0
        %375 = vmatpush2.msra.mxu0 0.0
        %376 = vmatprep.subr.mxu0 0.0
        %377 = vmatpush2.msra.mxu0 0.0
        %378 = vmatprep.subr.mxu0 0.0
        %379 = vmatpush2.msra.mxu0 0.0
        %380 = vmatprep.subr.mxu0 0.0
        %381 = vmatpush2.msra.mxu0 0.0
        %382 = vmatprep.subr.mxu0 0.0
        %383 = vmatpush2.msra.mxu0 0.0
        %384 = vmatprep.subr.mxu0 0.0
        %385 = vmatpush2.msra.mxu0 0.0
        %386 = vmatprep.subr.mxu0 0.0
        %387 = vmatpush2.msra.mxu0 0.0
        %388 = vmatprep.subr.mxu0 0.0
        %389 = vmatpush2.msra.mxu0 0.0
        %390 = vmatprep.subr.mxu0 0.0
        %391 = vmatpush2.msra.mxu0 0.0
        %392 = vmatprep.mubr.f32.mxu0 0.0
        %393 = vmatmul.mubr.f32.gmra.mxu0 %v322
        %v394 = vpop.f32.mrf.mxu0
        %v395 = vadd.f32 0.0, %v394
        %v396 = vpop.f32.mrf.mxu0
        %397 = vdwg.mxu0
        %v398 = vxor.u32 %v395, 2147483648
        %v399 = vmul.f32 %v398, 1.442695
        %v400 = vpow.pop %v399
        %v401 = vadd.f32 %v400, 1.0
        %v402 = vrcp.pop %v401
        %v403 = vmul.f32 1.0, %v402
        %v404 = vlaneseq
        %v405 = vshrl.u32 %v404, 7
        %v406 = vsub.s32 0, %v405
        %v407 = vrot.slane %v403, %v406
        %409 = vbcast.lane.b32.xlu0 %v407, 256
        %v410 = vpop.permute.xlu0 %409
        %s412 = sor.u32 256, 8
        %413 = vbcast.lane.b32.xlu0 %v407, %s412
        %v414 = vpop.permute.xlu0 %413
        %s416 = sor.u32 256, 16
        %417 = vbcast.lane.b32.xlu0 %v407, %s416
        %v418 = vpop.permute.xlu0 %417
        %s420 = sor.u32 256, 24
        %421 = vbcast.lane.b32.xlu0 %v407, %s420
        %v422 = vpop.permute.xlu0 %421
        %v423 = vmul.f32 %v189, %v410
        %v424 = vmul.f32 %v190, %v414
        %v425 = vmul.f32 %v191, %v418
        %v426 = vmul.f32 %v192, %v422
        %427 = vst.msk [vmem:[%s188] sm:$0xff] %vm193, %v423
        %428 = vst.msk [vmem:[%s188 + $0x8] sm:$0xff] %vm193, %v424
        %429 = vst.msk [vmem:[%s188 + $0x10] sm:$0xff] %vm193, %v425
        %430 = vst.msk [vmem:[%s188 + $0x18] sm:$0xff] %vm193, %v426
        %s431 = sand.u32 %s96, 1
        %s432 = scalar_lea.sflag [#allocation4], %s431
        %s433 = sand.u32 %s96, 1
        %s434 = smul.addr %s433, 32
        %s435 = scalar_lea.vmem [#allocation5], %s434
        // Predicated region
        $region37: #{tpu_custom_call.1} parent=31 // pred_check
          %p436 = pneg %p106
        $region38: #{tpu_custom_call.1} parent=31 // pred_check_branch
          %438 = sbr.rel (%p436) target = $region40
        $region39: #{tpu_custom_call.1} parent=31 // pred_region
          %s440 = ssub.s32 512, 512
          %441 = vsyncadd %s432, %s440
          %s442 = smul.addr %s20, 4
          %s443 = smul.addr %s442, 128
          %s444 = scalar_lea.hbm %s3, %s443
          %s445 = sshll.u32 %s435, 4
          %s446 = int_to_ptr.vmem [resolvable:$true] %s445
          %451 = dma.vmem_to_hbm [thread:$0]  %s446, 512, %s444, %s432, 128, 128, 8
        $region40: #{tpu_custom_call.1} parent=31 // pred_fallthru
          _
      $region32: #{tpu_custom_call.1} parent=5 // pred_fallthru
        _
      %p452 = scmp.le.s32.totalorder 2, %s15
      // Predicated region
      $region41: #{tpu_custom_call.1} parent=5 // pred_check
        %p453 = pneg %p452
      $region42: #{tpu_custom_call.1} parent=5 // pred_check_branch
        %455 = sbr.rel (%p453) target = $region44
      $region43: #{tpu_custom_call.1} parent=5 // pred_region
        %s456 = ssub.s32 %s15, 2
        // Predicated region
        $region45: #{tpu_custom_call.1} parent=43 // pred_check
          %p457 = pneg %p112
        $region46: #{tpu_custom_call.1} parent=43 // pred_check_branch
          %459 = sbr.rel (%p457) target = $region48
        $region47: #{tpu_custom_call.1} parent=43 // pred_region
          %s460 = sand.u32 %s97, 1
          %s461 = scalar_lea.sflag [#allocation4], %s460
          %s462 = sand.u32 %s97, 1
          %s463 = smul.addr %s462, 32
          %s464 = scalar_lea.vmem [#allocation5], %s463
          %465 = dma.done %s461, 512
        $region48: #{tpu_custom_call.1} parent=43 // pred_fallthru
          _
      $region44: #{tpu_custom_call.1} parent=5 // pred_fallthru
        _
    $region6: #{tpu_custom_call.1} parent=1 // loop_footer
      %s19 = sadd.s32 1, %s15
    $region7: #{tpu_custom_call.1} parent=1 // loop_footer_branch
      %14 = sbr.rel target = $region3
    $region8: #{tpu_custom_call.1} parent=1 // loop_exit
      _
    %466 = vsyncpa [#allocation3], 1
    %s467 = scalar_lea.sflag [#allocation3], 1
    %468 = vsyncpa %s467, 1
    %469 = vsyncpa [#allocation4], 1
    %s470 = scalar_lea.sflag [#allocation4], 1
    %471 = vsyncpa %s470, 1

</llo_original>
